<compile_context>
chip_gen: v6e
topology: v6e:2x2x1
jax: 0.10.0
libtpu: 0.0.40
codegen_flags: <defaults>
</compile_context>

<pallas_src>
import functools

import jax
import jax.numpy as jnp
from jax.experimental import pallas as pl
from jax.experimental.pallas import tpu as pltpu


def adapter_kernel(x_ref, wd_ref, bd_ref, wu_ref, bu_ref, ln_w_ref, ln_b_ref,
                   o_ref, *, scale, ln_eps, add_residual, compute_dtype):
    # One (tm, D) row-tile of activations.  The same tile serves as the
    # residual, so x is streamed from HBM exactly once.
    x = x_ref[...].astype(jnp.float32)

    # --- LayerNorm ('in' option): statistics in fp32 ---
    mu = jnp.mean(x, axis=-1, keepdims=True)
    xc = x - mu
    var = jnp.mean(xc * xc, axis=-1, keepdims=True)
    xn = xc * jax.lax.rsqrt(var + ln_eps)
    xn = xn * ln_w_ref[...].astype(jnp.float32) + ln_b_ref[...].astype(jnp.float32)

    # --- down projection (MXU, bf16 operands, fp32 accumulate) + bias + ReLU ---
    down = jnp.dot(xn.astype(compute_dtype), wd_ref[...],
                   preferred_element_type=jnp.float32)
    down = jnp.maximum(down + bd_ref[...].astype(jnp.float32), 0.0)
    # dropout(p=0.0 / eval mode) == identity
    # TODO(synk): training-mode dropout (p > 0) not implemented.

    # --- up projection + bias + (optional) scale + (optional) residual ---
    up = jnp.dot(down.astype(compute_dtype), wu_ref[...],
                 preferred_element_type=jnp.float32)
    up = up + bu_ref[...].astype(jnp.float32)
    if scale != 1.0:          # static; skip the multiply for the default scale
        up = up * scale
    if add_residual:          # static; residual == already-loaded x tile
        up = up + x
    o_ref[...] = up.astype(o_ref.dtype)


def _round_up(n, m):
    return -(-n // m) * m


def _choose_tm(n_rows, d_model, in_itemsize, out_itemsize,
               requested=None, vmem_budget_bytes=28 << 20):
    """Largest row tile whose VMEM footprint fits the budget.

    Per row we account for the double-buffered input tile, the double-buffered
    output tile, and ~3 live fp32 intermediates of width D inside the body
    (x, normalized x / up, one temp).  The 28 MiB budget plus weight buffers
    stays well inside the 48 MiB vmem limit we request, which in turn fits
    v7x's 64 MiB physical VMEM (v5e/v6e have 128 MiB).
    """
    per_row = (2 * (in_itemsize + out_itemsize) + 12) * d_model
    tm = max(8, vmem_budget_bytes // max(per_row, 1))
    tm = min(tm, 512)
    if requested is not None:
        tm = min(tm, int(requested))
    if tm >= 128:
        tm = (tm // 128) * 128        # MXU-friendly LHS row count
    else:
        tm = max(8, (tm // 8) * 8)    # fp32 sublane granularity
    tm = min(tm, _round_up(n_rows, 8))
    return max(tm, 8)


def adapter_layer(x, w_down, b_down, w_up, b_up, ln_w, ln_b,
                  *, scale=1.0, ln_eps=1e-5, add_residual=True, residual=None,
                  tm=None, compute_dtype=jnp.bfloat16):
    """Adapter_Layer forward (adapter_layernorm_option='in', eval mode).

    x:      (B, S, D)
    w_down: (D, bottleneck)   -- transposed from PyTorch's (bottleneck, D)
    w_up:   (bottleneck, D)   -- transposed from PyTorch's (D, bottleneck)
    """
    B, S, D = x.shape
    bn = w_down.shape[1]
    N = B * S

    x2 = x.reshape(N, D)

    # Only fuse the residual add when the residual is x itself (the common /
    # default path).  An external residual is added outside the kernel.
    fuse_residual = bool(add_residual) and (residual is None)

    tm_eff = _choose_tm(N, D,
                        jnp.dtype(x.dtype).itemsize,
                        jnp.dtype(x.dtype).itemsize,
                        requested=tm)
    n_pad = _round_up(N, tm_eff)
    if n_pad != N:
        x2 = jnp.pad(x2, ((0, n_pad - N), (0, 0)))
    grid = (n_pad // tm_eff,)

    # Weights in bf16: halves weight HBM traffic and feeds the MXU's native
    # bf16 path.  Tiny (1, feat) params stay fp32 (LN/bias math is fp32).
    wd = w_down.astype(compute_dtype)
    wu = w_up.astype(compute_dtype)
    bd = b_down.reshape(1, bn).astype(jnp.float32)
    bu = b_up.reshape(1, D).astype(jnp.float32)
    lw = ln_w.reshape(1, D).astype(jnp.float32)
    lb = ln_b.reshape(1, D).astype(jnp.float32)

    kernel = functools.partial(
        adapter_kernel,
        scale=float(scale), ln_eps=float(ln_eps),
        add_residual=fuse_residual, compute_dtype=compute_dtype)

    # NOTE: the constant operands (weights/biases/LN params) have a constant
    # index_map, so Pallas never re-fetches them after the first grid step;
    # their double-buffer cost is small at realistic adapter dims, so the
    # default pipelining is kept.
    out2 = pl.pallas_call(
        kernel,
        out_shape=jax.ShapeDtypeStruct((n_pad, D), x.dtype),
        grid_spec=pltpu.PrefetchScalarGridSpec(
            num_scalar_prefetch=0,
            grid=grid,
            in_specs=[
                pl.BlockSpec((tm_eff, D), lambda i: (i, 0)),  # x tile (also residual)
                pl.BlockSpec((D, bn), lambda i: (0, 0)),      # W_down (bf16)
                pl.BlockSpec((1, bn), lambda i: (0, 0)),      # b_down
                pl.BlockSpec((bn, D), lambda i: (0, 0)),      # W_up (bf16)
                pl.BlockSpec((1, D), lambda i: (0, 0)),       # b_up
                pl.BlockSpec((1, D), lambda i: (0, 0)),       # LN weight
                pl.BlockSpec((1, D), lambda i: (0, 0)),       # LN bias
            ],
            out_specs=pl.BlockSpec((tm_eff, D), lambda i: (i, 0)),
        ),
        compiler_params=pltpu.CompilerParams(
            dimension_semantics=("parallel",),
            vmem_limit_bytes=48 * 1024 * 1024,
        ),
    )(x2, wd, bd, wu, bu, lw, lb)

    if n_pad != N:
        out2 = out2[:N]
    out = out2.reshape(B, S, D)

    if add_residual and residual is not None:
        out = out + residual
    return out


def reference(x, w_down, b_down, w_up, b_up, ln_w, ln_b,
              scale=1.0, ln_eps=1e-5, add_residual=True):
    mu = jnp.mean(x, axis=-1, keepdims=True)
    var = jnp.mean((x - mu) ** 2, axis=-1, keepdims=True)
    xn = (x - mu) / jnp.sqrt(var + ln_eps) * ln_w + ln_b
    down = jnp.maximum(xn @ w_down + b_down, 0.0)
    up = (down @ w_up + b_up) * scale
    return up + x if add_residual else up


if __name__ == "__main__":
    B, S, D, BN = 2, 8, 32, 8   # batch, seq, d_model, bottleneck

    key = jax.random.PRNGKey(0)
    kx, kd, ku = jax.random.split(key, 3)

    x = jax.random.normal(kx, (B, S, D), dtype=jnp.float32)

    # Deterministic "bert" init: linear weights ~ N(0, 0.02), biases zero,
    # LayerNorm weight = 1, bias = 0.  PyTorch stores Linear weight as
    # (out, in); we pass the transposed (in, out) layout used for x @ W.
    w_down = 0.02 * jax.random.normal(kd, (D, BN), dtype=jnp.float32)
    b_down = jnp.zeros((BN,), dtype=jnp.float32)
    w_up = 0.02 * jax.random.normal(ku, (BN, D), dtype=jnp.float32)
    b_up = jnp.zeros((D,), dtype=jnp.float32)
    ln_w = jnp.ones((D,), dtype=jnp.float32)
    ln_b = jnp.zeros((D,), dtype=jnp.float32)

    # Default path: scale=1.0, fused residual.
    out = adapter_layer(x, w_down, b_down, w_up, b_up, ln_w, ln_b,
                        scale=1.0, add_residual=True)
    out = jax.block_until_ready(out)
    ref = reference(x, w_down, b_down, w_up, b_up, ln_w, ln_b)
    assert out.shape == (B, S, D)
    # bf16 MXU operands -> slightly looser tolerance than pure fp32.
    assert jnp.allclose(out, ref, atol=1e-2, rtol=1e-2), "mismatch vs reference"

    # Exercise the static scale / no-residual branches as well.
    out2 = adapter_layer(x, w_down, b_down, w_up, b_up, ln_w, ln_b,
                         scale=0.5, add_residual=False)
    out2 = jax.block_until_ready(out2)
    ref2 = reference(x, w_down, b_down, w_up, b_up, ln_w, ln_b,
                     scale=0.5, add_residual=False)
    assert jnp.allclose(out2, ref2, atol=1e-2, rtol=1e-2), "mismatch (scaled)"

    print("KERNEL_OK")
</pallas_src>

<mosaic_0001>
module attributes {stable_mosaic.version = 11 : i64} {
  func.func @adapter_kernel(%arg0: i32, %arg1: memref<16x32xf32, #tpu.memory_space<vmem>>, %arg2: memref<32x8xbf16, #tpu.memory_space<vmem>>, %arg3: memref<1x8xf32, #tpu.memory_space<vmem>>, %arg4: memref<8x32xbf16, #tpu.memory_space<vmem>>, %arg5: memref<1x32xf32, #tpu.memory_space<vmem>>, %arg6: memref<1x32xf32, #tpu.memory_space<vmem>>, %arg7: memref<1x32xf32, #tpu.memory_space<vmem>>, %arg8: memref<16x32xf32, #tpu.memory_space<vmem>>) attributes {dimension_semantics = [#tpu.dimension_semantics<parallel>], iteration_bounds = array<i64: 1>, scalar_prefetch = 0 : i64, scratch_operands = 0 : i64, tpu.core_type = #tpu.core_type<tc>, window_params = [{transform_indices = @transform_0, window_bounds = array<i64: 16, 32>}, {pipeline_mode = #tpu.pipeline_mode<synchronous>, transform_indices = @transform_1, window_bounds = array<i64: 32, 8>}, {pipeline_mode = #tpu.pipeline_mode<synchronous>, transform_indices = @transform_2, window_bounds = array<i64: 1, 8>}, {pipeline_mode = #tpu.pipeline_mode<synchronous>, transform_indices = @transform_3, window_bounds = array<i64: 8, 32>}, {pipeline_mode = #tpu.pipeline_mode<synchronous>, transform_indices = @transform_4, window_bounds = array<i64: 1, 32>}, {pipeline_mode = #tpu.pipeline_mode<synchronous>, transform_indices = @transform_5, window_bounds = array<i64: 1, 32>}, {pipeline_mode = #tpu.pipeline_mode<synchronous>, transform_indices = @transform_6, window_bounds = array<i64: 1, 32>}, {transform_indices = @transform_7, window_bounds = array<i64: 16, 32>}]} {
    %c0 = arith.constant 0 : index
    %c0_0 = arith.constant 0 : index
    %0 = vector.load %arg1[%c0, %c0_0] : memref<16x32xf32, #tpu.memory_space<vmem>>, vector<16x32xf32>
    %cst = arith.constant dense<0.000000e+00> : vector<16xf32>
    %1 = vector.multi_reduction <add>, %0, %cst [1] : vector<16x32xf32> to vector<16xf32>
    %2 = vector.shape_cast %1 : vector<16xf32> to vector<16x1xf32>
    %cst_1 = arith.constant 3.200000e+01 : f32
    %3 = vector.broadcast %cst_1 : f32 to vector<16x1xf32>
    %4 = arith.divf %2, %3 : vector<16x1xf32>
    %5 = vector.broadcast %4 : vector<16x1xf32> to vector<16x32xf32>
    %6 = arith.subf %0, %5 : vector<16x32xf32>
    %7 = arith.mulf %6, %6 : vector<16x32xf32>
    %cst_2 = arith.constant dense<0.000000e+00> : vector<16xf32>
    %8 = vector.multi_reduction <add>, %7, %cst_2 [1] : vector<16x32xf32> to vector<16xf32>
    %9 = vector.shape_cast %8 : vector<16xf32> to vector<16x1xf32>
    %cst_3 = arith.constant 3.200000e+01 : f32
    %10 = vector.broadcast %cst_3 : f32 to vector<16x1xf32>
    %11 = arith.divf %9, %10 : vector<16x1xf32>
    %cst_4 = arith.constant 9.99999974E-6 : f32
    %12 = vector.broadcast %cst_4 : f32 to vector<16x1xf32>
    %13 = arith.addf %11, %12 : vector<16x1xf32>
    %14 = math.rsqrt %13 : vector<16x1xf32>
    %15 = vector.broadcast %14 : vector<16x1xf32> to vector<16x32xf32>
    %16 = arith.mulf %6, %15 : vector<16x32xf32>
    %c0_5 = arith.constant 0 : index
    %c0_6 = arith.constant 0 : index
    %17 = vector.load %arg6[%c0_5, %c0_6] : memref<1x32xf32, #tpu.memory_space<vmem>>, vector<1x32xf32>
    %18 = vector.broadcast %17 : vector<1x32xf32> to vector<16x32xf32>
    %19 = arith.mulf %16, %18 : vector<16x32xf32>
    %c0_7 = arith.constant 0 : index
    %c0_8 = arith.constant 0 : index
    %20 = vector.load %arg7[%c0_7, %c0_8] : memref<1x32xf32, #tpu.memory_space<vmem>>, vector<1x32xf32>
    %21 = vector.broadcast %20 : vector<1x32xf32> to vector<16x32xf32>
    %22 = arith.addf %19, %21 : vector<16x32xf32>
    %23 = arith.truncf %22 : vector<16x32xf32> to vector<16x32xbf16>
    %c0_9 = arith.constant 0 : index
    %c0_10 = arith.constant 0 : index
    %24 = vector.load %arg2[%c0_9, %c0_10] : memref<32x8xbf16, #tpu.memory_space<vmem>>, vector<32x8xbf16>
    %cst_11 = arith.constant dense<0.000000e+00> : vector<16x8xf32>
    %25 = tpu.matmul %23, %24, %cst_11 {dimension_numbers = #tpu.dot_dimension_numbers<[1], [0], [0], [1], [0, 0, 1, 1], [], []>} : vector<16x32xbf16>, vector<32x8xbf16>, vector<16x8xf32> -> vector<16x8xf32>
    %c0_12 = arith.constant 0 : index
    %c0_13 = arith.constant 0 : index
    %26 = vector.load %arg3[%c0_12, %c0_13] : memref<1x8xf32, #tpu.memory_space<vmem>>, vector<1x8xf32>
    %27 = vector.broadcast %26 : vector<1x8xf32> to vector<16x8xf32>
    %28 = arith.addf %25, %27 : vector<16x8xf32>
    %cst_14 = arith.constant 0.000000e+00 : f32
    %29 = vector.broadcast %cst_14 : f32 to vector<16x8xf32>
    %30 = arith.maximumf %28, %29 : vector<16x8xf32>
    %31 = arith.truncf %30 : vector<16x8xf32> to vector<16x8xbf16>
    %c0_15 = arith.constant 0 : index
    %c0_16 = arith.constant 0 : index
    %32 = vector.load %arg4[%c0_15, %c0_16] : memref<8x32xbf16, #tpu.memory_space<vmem>>, vector<8x32xbf16>
    %cst_17 = arith.constant dense<0.000000e+00> : vector<16x32xf32>
    %33 = tpu.matmul %31, %32, %cst_17 {dimension_numbers = #tpu.dot_dimension_numbers<[1], [0], [0], [1], [0, 0, 1, 1], [], []>} : vector<16x8xbf16>, vector<8x32xbf16>, vector<16x32xf32> -> vector<16x32xf32>
    %c0_18 = arith.constant 0 : index
    %c0_19 = arith.constant 0 : index
    %34 = vector.load %arg5[%c0_18, %c0_19] : memref<1x32xf32, #tpu.memory_space<vmem>>, vector<1x32xf32>
    %35 = vector.broadcast %34 : vector<1x32xf32> to vector<16x32xf32>
    %36 = arith.addf %33, %35 : vector<16x32xf32>
    %37 = arith.addf %36, %0 : vector<16x32xf32>
    %c0_20 = arith.constant 0 : index
    %c0_21 = arith.constant 0 : index
    %38 = vector.load %arg8[%c0_20, %c0_21] : memref<16x32xf32, #tpu.memory_space<vmem>>, vector<16x32xf32>
    tpu.vector_store %arg8[%c0_20, %c0_21], %37 {strides = array<i32>} : memref<16x32xf32, #tpu.memory_space<vmem>>, vector<16x32xf32>,
    return
  }
  func.func @transform_0(%arg0: i32) -> (i32, i32) {
    %c0_i32 = arith.constant 0 : i32
    %c0_i32_0 = arith.constant 0 : i32
    return %arg0, %c0_i32 : i32, i32
  }
  func.func @transform_1(%arg0: i32) -> (i32, i32) {
    %c0_i32 = arith.constant 0 : i32
    %c0_i32_0 = arith.constant 0 : i32
    %c0_i32_1 = arith.constant 0 : i32
    return %c0_i32, %c0_i32_0 : i32, i32
  }
  func.func @transform_2(%arg0: i32) -> (i32, i32) {
    %c0_i32 = arith.constant 0 : i32
    %c0_i32_0 = arith.constant 0 : i32
    %c0_i32_1 = arith.constant 0 : i32
    return %c0_i32, %c0_i32_0 : i32, i32
  }
  func.func @transform_3(%arg0: i32) -> (i32, i32) {
    %c0_i32 = arith.constant 0 : i32
    %c0_i32_0 = arith.constant 0 : i32
    %c0_i32_1 = arith.constant 0 : i32
    return %c0_i32, %c0_i32_0 : i32, i32
  }
  func.func @transform_4(%arg0: i32) -> (i32, i32) {
    %c0_i32 = arith.constant 0 : i32
    %c0_i32_0 = arith.constant 0 : i32
    %c0_i32_1 = arith.constant 0 : i32
    return %c0_i32, %c0_i32_0 : i32, i32
  }
  func.func @transform_5(%arg0: i32) -> (i32, i32) {
    %c0_i32 = arith.constant 0 : i32
    %c0_i32_0 = arith.constant 0 : i32
    %c0_i32_1 = arith.constant 0 : i32
    return %c0_i32, %c0_i32_0 : i32, i32
  }
  func.func @transform_6(%arg0: i32) -> (i32, i32) {
    %c0_i32 = arith.constant 0 : i32
    %c0_i32_0 = arith.constant 0 : i32
    %c0_i32_1 = arith.constant 0 : i32
    return %c0_i32, %c0_i32_0 : i32, i32
  }
  func.func @transform_7(%arg0: i32) -> (i32, i32) {
    %c0_i32 = arith.constant 0 : i32
    %c0_i32_0 = arith.constant 0 : i32
    return %arg0, %c0_i32 : i32, i32
  }
}

</mosaic_0001>

<llo_original>
// kernel: tpu_custom_call.1
$region0: #{tpu_custom_call.1}
  #allocation0 [shape = 'u32[]', space=smem, size = 0x4, offset = 0x4, fixed_abs, tag = 'smem constant byte address 0x4 - core index']
  #allocation1 [shape = 'u32[144,128]{1,0:T(1,128)}', space=vmem, size = 0x12000, scoped, tag = 'internal scratch']
  %s0 = inlined_call_operand.vmem [shape: f32[16,32], index: 0, kind: input, shape index: {}]
  %s1 = inlined_call_operand.vmem [shape: bf16[32,8], index: 1, kind: input, shape index: {}]
  %s2 = inlined_call_operand.vmem [shape: f32[1,8], index: 2, kind: input, shape index: {}]
  %s3 = inlined_call_operand.vmem [shape: bf16[8,32], index: 3, kind: input, shape index: {}]
  %s4 = inlined_call_operand.vmem [shape: f32[1,32], index: 4, kind: input, shape index: {}]
  %s5 = inlined_call_operand.vmem [shape: f32[1,32], index: 5, kind: input, shape index: {}]
  %s6 = inlined_call_operand.vmem [shape: f32[1,32], index: 6, kind: input, shape index: {}]
  %s7 = inlined_call_operand.hbm [shape: f32[16,32], index: 7, kind: output, shape index: {}]
  %s8 = sld [smem:[#allocation0]]
  $region38: #{tpu_custom_call.1} parent=0
    _
  %s10 = ssub.s32 1, %s8
  %s11 = scalar_select 0, %s10, %s8
  $region1: #{tpu_custom_call.1} parent=0
    #allocation2 [shape = 'u8[8192]{0}', space=vmem, size = 0x2000, scoped, tag = 'output window, operand 0, single buffered']
    #allocation3 [shape = 's32[1]{0}', space=sflag, size = 0x4, scoped, tag = 'scoped memory for tpu_custom_call.1']
    %12 = vsyncpa [#allocation3], 0
    // Predicated region
    $region2: #{tpu_custom_call.1} parent=1 // pred_check
      _
    $region3: #{tpu_custom_call.1} parent=1 // pred_check_branch
      %14 = sbr.rel (0) target = $region5
    $region4: #{tpu_custom_call.1} parent=1 // pred_region
      _
    $region5: #{tpu_custom_call.1} parent=1 // pred_fallthru
      _
    // Predicated region
    $region6: #{tpu_custom_call.1} parent=1 // pred_check
      _
    $region7: #{tpu_custom_call.1} parent=1 // pred_check_branch
      %16 = sbr.rel (0) target = $region9
    $region8: #{tpu_custom_call.1} parent=1 // pred_region
      _
    $region9: #{tpu_custom_call.1} parent=1 // pred_fallthru
      _
    // Predicated region
    $region10: #{tpu_custom_call.1} parent=1 // pred_check
      _
    $region11: #{tpu_custom_call.1} parent=1 // pred_check_branch
      %18 = sbr.rel (0) target = $region13
    $region12: #{tpu_custom_call.1} parent=1 // pred_region
      _
    $region13: #{tpu_custom_call.1} parent=1 // pred_fallthru
      _
    // Predicated region
    $region14: #{tpu_custom_call.1} parent=1 // pred_check
      _
    $region15: #{tpu_custom_call.1} parent=1 // pred_check_branch
      %20 = sbr.rel (0) target = $region17
    $region16: #{tpu_custom_call.1} parent=1 // pred_region
      _
    $region17: #{tpu_custom_call.1} parent=1 // pred_fallthru
      _
    // Predicated region
    $region18: #{tpu_custom_call.1} parent=1 // pred_check
      _
    $region19: #{tpu_custom_call.1} parent=1 // pred_check_branch
      %22 = sbr.rel (0) target = $region21
    $region20: #{tpu_custom_call.1} parent=1 // pred_region
      _
    $region21: #{tpu_custom_call.1} parent=1 // pred_fallthru
      _
    // Predicated region
    $region22: #{tpu_custom_call.1} parent=1 // pred_check
      _
    $region23: #{tpu_custom_call.1} parent=1 // pred_check_branch
      %24 = sbr.rel (0) target = $region25
    $region24: #{tpu_custom_call.1} parent=1 // pred_region
      _
    $region25: #{tpu_custom_call.1} parent=1 // pred_fallthru
      _
    // Predicated region
    $region26: #{tpu_custom_call.1} parent=1 // pred_check
      _
    $region27: #{tpu_custom_call.1} parent=1 // pred_check_branch
      %26 = sbr.rel (0) target = $region29
    $region28: #{tpu_custom_call.1} parent=1 // pred_region
      _
    $region29: #{tpu_custom_call.1} parent=1 // pred_fallthru
      _
    %v28 = vld [vmem:[%s0] sm:$0xff]
    %v29 = vld [vmem:[%s0 + $0x8] sm:$0xff]
    %vm30 = vcmask 261120
    %v31 = vsel %vm30, %v28, 0.0
    %32 = vadd.xlane.f32.xlu0 %v31
    %v33 = vpop.xlane.xlu0 %32
    %v34 = vsel %vm30, %v29, 0.0
    %35 = vadd.xlane.f32.xlu0 %v34
    %v36 = vpop.xlane.xlu0 %35
    %v37 = vrcp.pop 32.0
    %v38 = vmul.f32 %v33, %v37
    %v39 = vmul.f32 %v36, %v37
    %v40 = vsub.f32 %v28, %v38
    %v41 = vsub.f32 %v29, %v39
    %v42 = vmul.f32 %v40, %v40
    %v43 = vmul.f32 %v41, %v41
    %v44 = vsel %vm30, %v42, 0.0
    %45 = vadd.xlane.f32.xlu0 %v44
    %v46 = vpop.xlane.xlu0 %45
    %v47 = vsel %vm30, %v43, 0.0
    %48 = vadd.xlane.f32.xlu0 %v47
    %v49 = vpop.xlane.xlu0 %48
    %v50 = vmul.f32 %v46, %v37
    %v51 = vmul.f32 %v49, %v37
    %v52 = vadd.f32 %v50, 1e-05
    %v53 = vadd.f32 %v51, 1e-05
    %v54 = vrsqrt.pop %v52
    %v55 = vrsqrt.pop %v53
    %v56 = vmul.f32 %v40, %v54
    %v57 = vmul.f32 %v41, %v55
    %v58 = vld [vmem:[%s5] sm:$0x1]
    %v60 = vlaneseq
    %v61 = vshrl.u32 %v60, 7
    %v62 = vsub.s32 0, %v61
    %v63 = vrot.slane %v58, %v62
    %v65 = vmul.f32 %v56, %v63
    %v66 = vmul.f32 %v57, %v63
    %v67 = vld [vmem:[%s6] sm:$0x1]
    %v69 = vlaneseq
    %v70 = vshrl.u32 %v69, 7
    %v71 = vsub.s32 0, %v70
    %v72 = vrot.slane %v67, %v71
    %v74 = vadd.f32 %v65, %v72
    %v75 = vadd.f32 %v66, %v72
    %v76 = vpack.c.bf16 %v75, %v74
    %v77 = vld [vmem:[%s1] sm:$0xf]
    %v78 = vld [vmem:[%s1 + $0x4] sm:$0xf]
    %v79 = vld [vmem:[%s1 + $0x8] sm:$0xf]
    %v80 = vld [vmem:[%s1 + $0xc] sm:$0xf]
    %v81 = vld [vmem:[%s2] sm:$0x1]
    %v83 = vlaneseq
    %v84 = vshrl.u32 %v83, 7
    %v85 = vsub.s32 0, %v84
    %v86 = vrot.slane %v81, %v85
    %v92 = vunpack.c.l.b16 %v77
    %v93 = vunpack.c.l.b16 %v78
    %v94 = vunpack.c.l.b16 %v79
    %v95 = vunpack.c.l.b16 %v80
    %v96 = vpack.c.b16 %v93, %v92
    %v97 = vpack.c.b16 %v95, %v94
    %v101 = vsel %vm30, %v76, 0
    %103 = vmatprep.subr.bf16.mxu0 0
    %104 = vmatpush1.bf16.msra.mxu0 0
    %105 = vmatprep.subr.bf16.mxu0 0
    %106 = vmatpush1.bf16.msra.mxu0 0
    %107 = vmatprep.subr.bf16.mxu0 0
    %108 = vmatpush1.bf16.msra.mxu0 0
    %109 = vmatprep.subr.bf16.mxu0 0
    %110 = vmatpush1.bf16.msra.mxu0 0
    %111 = vmatprep.subr.bf16.mxu0 0
    %112 = vmatpush1.bf16.msra.mxu0 0
    %113 = vmatprep.subr.bf16.mxu0 0
    %114 = vmatpush1.bf16.msra.mxu0 0
    %115 = vmatprep.subr.bf16.mxu0 0
    %116 = vmatpush1.bf16.msra.mxu0 %v97
    %117 = vmatprep.subr.bf16.mxu0 0
    %118 = vmatpush1.bf16.msra.mxu0 %v96
    %119 = vmatprep.subr.bf16.mxu0 0
    %120 = vmatpush2.bf16.msra.mxu0 0
    %121 = vmatprep.subr.bf16.mxu0 0
    %122 = vmatpush2.bf16.msra.mxu0 0
    %123 = vmatprep.subr.bf16.mxu0 0
    %124 = vmatpush2.bf16.msra.mxu0 0
    %125 = vmatprep.subr.bf16.mxu0 0
    %126 = vmatpush2.bf16.msra.mxu0 0
    %127 = vmatprep.subr.bf16.mxu0 0
    %128 = vmatpush2.bf16.msra.mxu0 0
    %129 = vmatprep.subr.bf16.mxu0 0
    %130 = vmatpush2.bf16.msra.mxu0 0
    %131 = vmatprep.subr.bf16.mxu0 0
    %132 = vmatpush2.bf16.msra.mxu0 0
    %133 = vmatprep.subr.bf16.mxu0 0
    %134 = vmatpush2.bf16.msra.mxu0 0
    %135 = vmatprep.mubr.bf16.mxu0 0
    %136 = vmatmul.mubr.bf16.gmra.mxu0 %v101
    %v137 = vpop.f32.mrf.mxu0
    %v138 = vadd.f32 %v86, %v137
    %v139 = vpop.f32.mrf.mxu0
    %v140 = vpop.f32.mrf.mxu0
    %v141 = vadd.f32 %v86, %v140
    %v142 = vpop.f32.mrf.mxu0
    %143 = vdwg.mxu0
    %v144 = vmax.f32 %v138, 0.0
    %v145 = vmax.f32 %v141, 0.0
    %v146 = vpack.c.bf16 %v145, %v144
    %v147 = vld [vmem:[%s3] sm:$0xf]
    %v148 = vld [vmem:[%s4] sm:$0x1]
    %v150 = vlaneseq
    %v151 = vshrl.u32 %v150, 7
    %v152 = vsub.s32 0, %v151
    %v153 = vrot.slane %v148, %v152
    %vm155 = vcmask 64512
    %v157 = vsel %vm155, %v146, 0
    %vm159 = vcmask 1043456
    %v161 = vsel %vm159, %v147, 0
    %163 = vmatprep.subr.bf16.mxu0 0
    %164 = vmatpush1.bf16.msra.mxu0 0
    %165 = vmatprep.subr.bf16.mxu0 0
    %166 = vmatpush1.bf16.msra.mxu0 0
    %167 = vmatprep.subr.bf16.mxu0 0
    %168 = vmatpush1.bf16.msra.mxu0 0
    %169 = vmatprep.subr.bf16.mxu0 0
    %170 = vmatpush1.bf16.msra.mxu0 0
    %171 = vmatprep.subr.bf16.mxu0 0
    %172 = vmatpush1.bf16.msra.mxu0 0
    %173 = vmatprep.subr.bf16.mxu0 0
    %174 = vmatpush1.bf16.msra.mxu0 0
    %175 = vmatprep.subr.bf16.mxu0 0
    %176 = vmatpush1.bf16.msra.mxu0 0
    %177 = vmatprep.subr.bf16.mxu0 0
    %178 = vmatpush1.bf16.msra.mxu0 %v161
    %179 = vmatprep.subr.bf16.mxu0 0
    %180 = vmatpush2.bf16.msra.mxu0 0
    %181 = vmatprep.subr.bf16.mxu0 0
    %182 = vmatpush2.bf16.msra.mxu0 0
    %183 = vmatprep.subr.bf16.mxu0 0
    %184 = vmatpush2.bf16.msra.mxu0 0
    %185 = vmatprep.subr.bf16.mxu0 0
    %186 = vmatpush2.bf16.msra.mxu0 0
    %187 = vmatprep.subr.bf16.mxu0 0
    %188 = vmatpush2.bf16.msra.mxu0 0
    %189 = vmatprep.subr.bf16.mxu0 0
    %190 = vmatpush2.bf16.msra.mxu0 0
    %191 = vmatprep.subr.bf16.mxu0 0
    %192 = vmatpush2.bf16.msra.mxu0 0
    %193 = vmatprep.subr.bf16.mxu0 0
    %194 = vmatpush2.bf16.msra.mxu0 0
    %195 = vmatprep.mubr.bf16.mxu0 0
    %196 = vmatmul.mubr.bf16.gmra.mxu0 %v157
    %v197 = vpop.f32.mrf.mxu0
    %v198 = vadd.f32 %v153, %v197
    %v199 = vpop.f32.mrf.mxu0
    %v200 = vpop.f32.mrf.mxu0
    %v201 = vadd.f32 %v153, %v200
    %v202 = vpop.f32.mrf.mxu0
    %203 = vdwg.mxu0
    %v204 = vadd.f32 %v198, %v28
    %v205 = vadd.f32 %v201, %v29
    %206 = vst.msk [vmem:[#allocation2] sm:$0xff] %vm30, %v204
    %207 = vst.msk [vmem:[#allocation2 + $0x8] sm:$0xff] %vm30, %v205
    // Predicated region
    $region30: #{tpu_custom_call.1} parent=1 // pred_check
      _
    $region31: #{tpu_custom_call.1} parent=1 // pred_check_branch
      %209 = sbr.rel (0) target = $region33
    $region32: #{tpu_custom_call.1} parent=1 // pred_region
      %s211 = ssub.s32 256, 256
      %212 = vsyncadd [#allocation3], %s211
      %s213 = sshll.u32 [#allocation2], 4
      %s214 = int_to_ptr.vmem [resolvable:$true] %s213
      %219 = dma.vmem_to_hbm [thread:$0]  %s214, 256, %s7, [#allocation3], 128, 128, 8
    $region33: #{tpu_custom_call.1} parent=1 // pred_fallthru
      _
    // Predicated region
    $region34: #{tpu_custom_call.1} parent=1 // pred_check
      _
    $region35: #{tpu_custom_call.1} parent=1 // pred_check_branch
      %221 = sbr.rel (0) target = $region37
    $region36: #{tpu_custom_call.1} parent=1 // pred_region
      %222 = dma.done [#allocation3], 256
    $region37: #{tpu_custom_call.1} parent=1 // pred_fallthru
      _
    %223 = vsyncpa [#allocation3], 1

</llo_original>
